<compile_context>
chip_gen: v7x
topology: tpu7x:2x2x1
jax: 0.10.0
libtpu: 0.0.40
codegen_flags: <defaults>
</compile_context>

<pallas_src>
import functools

import jax
import jax.numpy as jnp
from jax import lax
from jax.experimental import pallas as pl
from jax.experimental.pallas import tpu as pltpu

GAMMA = 2.0   # MONAI default; the kernel exploits gamma == 2 (squared sigmoid)
CLASS_WEIGHTS = [0.34523039, 23.35764161, 0.60372157, 3.09578992, 12.32148783]

LANE = 128          # TPU lane width
SUB_TARGET = 4096   # max sublane rows per block (2 MiB f32 / 1 MiB bf16 input)


def _round_up(x, m):
    return (x + m - 1) // m * m


def _focal_kernel(w_ref, x_ref, t_ref, out_ref, *,
                  n_valid, block_rows, hard_targets, needs_mask):
    """Grid = (B*C rows, lane tiles); one (1, block_rows, 128) block per step."""
    r = pl.program_id(0)          # which (batch, channel) row
    j = pl.program_id(1)          # which lane tile inside the row

    # Stream in native dtype, do the math in f32 (v5e/v6e VPU/EUP are f32).
    x = x_ref[0].astype(jnp.float32)      # (block_rows, LANE)
    t = t_ref[0].astype(jnp.float32)

    # BCE with logits: x - x*t - log_sigmoid(x)
    ex = jnp.exp(-jnp.abs(x))
    logsig_x = jnp.minimum(x, 0.0) - jnp.log1p(ex)
    bce = x - x * t - logsig_x

    # Focal modulation with gamma == 2:
    #   exp(gamma * log_sigmoid(-x*(2t-1))) == sigmoid(-x*(2t-1))**2
    if hard_targets:
        # Exact only for t in {0,1}: sigmoid(-x*(2t-1)) is sigmoid(-x) (t=1)
        # or sigmoid(x) (t=0); reuse exp(-|x|) and a single exact reciprocal
        # -> ~2 EUP transcendentals per element.
        inv_den = 1.0 / (1.0 + ex)
        sig_x = jnp.where(x >= 0.0, 1.0, ex) * inv_den      # sigmoid(x)
        sig_nx = jnp.where(x >= 0.0, ex, 1.0) * inv_den     # sigmoid(-x)
        p = jnp.where(t > 0.5, sig_nx, sig_x)
    else:
        z = -x * (2.0 * t - 1.0)
        ez = jnp.exp(-jnp.abs(z))
        p = jnp.where(z >= 0.0, 1.0, ez) / (1.0 + ez)        # sigmoid(z), stable
    loss = p * p * bce

    def emit(vals):
        # Sublane-group partial reduce only: (R,128)->(R/8,8,128)->sum(axis=0)
        # is pure cross-vreg VPU adds (no XLU), result stays lane-dense.
        part = jnp.sum(vals.reshape(-1, 8, LANE), axis=0)    # (8, LANE)
        # Class weight (with the mean 1/N factor folded in) applied once.
        out_ref[0, 0] = w_ref[r] * part

    if needs_mask:
        last = pl.num_programs(1) - 1

        @pl.when(j < last)
        def _():
            emit(loss)

        @pl.when(j == last)
        def _():
            # Only the final lane-tile of a row can hold lane padding or
            # partial-block garbage; scalar threshold, local index math.
            sub = lax.broadcasted_iota(jnp.int32, loss.shape, 0)
            ln = lax.broadcasted_iota(jnp.int32, loss.shape, 1)
            thresh = n_valid - j * (block_rows * LANE)
            emit(jnp.where(sub * LANE + ln < thresh, loss, 0.0))
    else:
        emit(loss)


def focal_loss(inputs, targets, *, hard_targets=False):
    """inputs, targets: (B, C, H, W) with C == len(CLASS_WEIGHTS).

    Equivalent to monai.losses.FocalLoss(include_background=True, gamma=2.0,
    weight=CLASS_WEIGHTS, reduction="mean") applied to (inputs, targets).
    Set hard_targets=True only if targets are strictly {0,1}.
    """
    B, C, H, W = inputs.shape
    assert C == len(CLASS_WEIGHTS)
    HW = H * W
    rows_total = B * C
    # int32 flat-index mask; only an issue for absurdly large planes.
    assert HW < 2**31 - SUB_TARGET * LANE

    # bool targets -> narrow int so the in-kernel cast is well-defined.
    if targets.dtype == jnp.bool_:
        targets = targets.astype(jnp.int8)

    # Lane-tile geometry: each (b, c) row's HW elements viewed as (M, 128).
    M = pl.cdiv(HW, LANE)
    R = min(_round_up(M, 8), SUB_TARGET)          # sublane rows per block
    n_blocks = pl.cdiv(M, R)
    lane_pad = M * LANE - HW
    needs_mask = (lane_pad != 0) or (M % R != 0)

    x = inputs.reshape(rows_total, HW)
    t = targets.reshape(rows_total, HW)
    if lane_pad:
        # Only needed when HW is not a multiple of 128 (required for the
        # (rows, M, 128) view).  Sublane / partial-block overhang is handled
        # by Pallas partial blocks + the in-kernel mask — no host copy.
        x = jnp.pad(x, ((0, 0), (0, lane_pad)))
        t = jnp.pad(t, ((0, 0), (0, lane_pad)))
    x = x.reshape(rows_total, M, LANE)
    t = t.reshape(rows_total, M, LANE)

    # Per-row class weight with the mean-reduction 1/N folded in.
    total = float(B * C * HW)
    w = jnp.tile(jnp.asarray(CLASS_WEIGHTS, jnp.float32) / total, B)

    kernel = functools.partial(
        _focal_kernel, n_valid=HW, block_rows=R,
        hard_targets=hard_targets, needs_mask=needs_mask)

    partials = pl.pallas_call(
        kernel,
        out_shape=jax.ShapeDtypeStruct((rows_total, n_blocks, 8, LANE),
                                       jnp.float32),
        grid=(rows_total, n_blocks),
        in_specs=[
            pl.BlockSpec(memory_space=pltpu.SMEM),                # weights
            pl.BlockSpec((1, R, LANE), lambda r, j: (r, j, 0)),   # logits
            pl.BlockSpec((1, R, LANE), lambda r, j: (r, j, 0)),   # targets
        ],
        out_specs=pl.BlockSpec((1, 1, 8, LANE), lambda r, j: (r, j, 0, 0)),
        compiler_params=pltpu.CompilerParams(
            # No reduction axis: every block writes its own lane-dense
            # partial, so both axes are parallel (v7x 2-TC load balance).
            dimension_semantics=("parallel", "parallel"),
            # Worst case ~8 MiB (2 inputs x 2 bufs x 2 MiB f32) — well under.
            vmem_limit_bytes=32 * 1024 * 1024,
        ),
    )(w, x, t)

    return jnp.sum(partials)


def _focal_loss_ref(inputs, targets):
    # Pure-JAX reference mirroring monai.losses.FocalLoss (sigmoid form).
    x = inputs.astype(jnp.float32)
    t = targets.astype(jnp.float32)
    bce = x - x * t - jax.nn.log_sigmoid(x)
    invprobs = jax.nn.log_sigmoid(-x * (2.0 * t - 1.0))
    loss = jnp.exp(invprobs * GAMMA) * bce
    w = jnp.asarray(CLASS_WEIGHTS, jnp.float32).reshape(1, -1, 1, 1)
    return jnp.mean(w * loss)


if __name__ == "__main__":
    key = jax.random.PRNGKey(0)
    k1, k2, k3, k4, k5, k6 = jax.random.split(key, 6)

    B, C = 2, 5

    # Case 1: one-hot targets, partial-block path (M=2 < R=8, in-kernel mask,
    # no host pad since 256 % 128 == 0).
    H = W = 16
    logits = jax.random.normal(k1, (B, C, H, W), dtype=jnp.float32)
    labels = jax.random.randint(k2, (B, H, W), 0, C)
    onehot = jax.nn.one_hot(labels, C, axis=1).astype(jnp.float32)  # (B,C,H,W)

    out = jax.block_until_ready(focal_loss(logits, onehot))
    ref = _focal_loss_ref(logits, onehot)
    assert jnp.allclose(out, ref, rtol=1e-5, atol=1e-6), (out, ref)

    # Same inputs through the reduced-transcendental hard-target path.
    out_hard = jax.block_until_ready(focal_loss(logits, onehot, hard_targets=True))
    assert jnp.allclose(out_hard, ref, rtol=1e-5, atol=1e-6), (out_hard, ref)

    # Case 2: soft targets, spatial size that tiles exactly (no-mask path).
    H = W = 32
    logits2 = jax.random.normal(k3, (B, C, H, W), dtype=jnp.float32)
    soft = jax.random.uniform(k4, (B, C, H, W), dtype=jnp.float32)

    out2 = jax.block_until_ready(focal_loss(logits2, soft))
    ref2 = _focal_loss_ref(logits2, soft)
    assert jnp.allclose(out2, ref2, rtol=1e-5, atol=1e-6), (out2, ref2)

    # Case 3: bf16 streaming + lane padding (HW=144 not a multiple of 128).
    H = W = 12
    logits3 = jax.random.normal(k5, (B, C, H, W)).astype(jnp.bfloat16)
    soft3 = jax.random.uniform(k6, (B, C, H, W)).astype(jnp.bfloat16)

    out3 = jax.block_until_ready(focal_loss(logits3, soft3))
    ref3 = _focal_loss_ref(logits3, soft3)
    assert jnp.allclose(out3, ref3, rtol=1e-5, atol=1e-5), (out3, ref3)

    print("KERNEL_OK")
</pallas_src>

<mosaic_0001>
module attributes {stable_mosaic.version = 11 : i64} {
  func.func @_focal_kernel(%arg0: i32, %arg1: i32, %arg2: memref<10xf32, #tpu.memory_space<smem>>, %arg3: memref<1x8x128xf32, #tpu.memory_space<vmem>>, %arg4: memref<1x8x128xf32, #tpu.memory_space<vmem>>, %arg5: memref<1x1x8x128xf32, #tpu.memory_space<vmem>>) attributes {dimension_semantics = [#tpu.dimension_semantics<parallel>, #tpu.dimension_semantics<parallel>], iteration_bounds = array<i64: 10, 1>, scalar_prefetch = 0 : i64, scratch_operands = 0 : i64, tpu.core_type = #tpu.core_type<tc>, window_params = [{transform_indices = @transform_0, window_bounds = array<i64: 10>}, {transform_indices = @transform_1, window_bounds = array<i64: 1, 8, 128>}, {transform_indices = @transform_2, window_bounds = array<i64: 1, 8, 128>}, {transform_indices = @transform_3, window_bounds = array<i64: 1, 1, 8, 128>}]} {
    %c0 = arith.constant 0 : index
    %c0_0 = arith.constant 0 : index
    %c0_1 = arith.constant 0 : index
    %0 = vector.load %arg3[%c0, %c0_0, %c0_1] : memref<1x8x128xf32, #tpu.memory_space<vmem>>, vector<1x8x128xf32>
    %1 = vector.shape_cast %0 : vector<1x8x128xf32> to vector<8x128xf32>
    %c0_2 = arith.constant 0 : index
    %c0_3 = arith.constant 0 : index
    %c0_4 = arith.constant 0 : index
    %2 = vector.load %arg4[%c0_2, %c0_3, %c0_4] : memref<1x8x128xf32, #tpu.memory_space<vmem>>, vector<1x8x128xf32>
    %3 = vector.shape_cast %2 : vector<1x8x128xf32> to vector<8x128xf32>
    %4 = math.absf %1 : vector<8x128xf32>
    %cst = arith.constant 0.000000e+00 : f32
    %5 = vector.broadcast %cst : f32 to vector<8x128xf32>
    %6 = arith.subf %5, %4 : vector<8x128xf32>
    %7 = math.exp %6 : vector<8x128xf32>
    %cst_5 = arith.constant 0.000000e+00 : f32
    %8 = vector.broadcast %cst_5 : f32 to vector<8x128xf32>
    %9 = arith.minimumf %1, %8 : vector<8x128xf32>
    %10 = math.log1p %7 : vector<8x128xf32>
    %11 = arith.subf %9, %10 : vector<8x128xf32>
    %12 = arith.mulf %1, %3 : vector<8x128xf32>
    %13 = arith.subf %1, %12 : vector<8x128xf32>
    %14 = arith.subf %13, %11 : vector<8x128xf32>
    %cst_6 = arith.constant 0.000000e+00 : f32
    %15 = vector.broadcast %cst_6 : f32 to vector<8x128xf32>
    %16 = arith.subf %15, %1 : vector<8x128xf32>
    %cst_7 = arith.constant 2.000000e+00 : f32
    %17 = vector.broadcast %cst_7 : f32 to vector<8x128xf32>
    %18 = arith.mulf %17, %3 : vector<8x128xf32>
    %cst_8 = arith.constant 1.000000e+00 : f32
    %19 = vector.broadcast %cst_8 : f32 to vector<8x128xf32>
    %20 = arith.subf %18, %19 : vector<8x128xf32>
    %21 = arith.mulf %16, %20 : vector<8x128xf32>
    %22 = math.absf %21 : vector<8x128xf32>
    %cst_9 = arith.constant 0.000000e+00 : f32
    %23 = vector.broadcast %cst_9 : f32 to vector<8x128xf32>
    %24 = arith.subf %23, %22 : vector<8x128xf32>
    %25 = math.exp %24 : vector<8x128xf32>
    %cst_10 = arith.constant 0.000000e+00 : f32
    %26 = vector.broadcast %cst_10 : f32 to vector<8x128xf32>
    %27 = arith.cmpf oge, %21, %26 : vector<8x128xf32>
    %cst_11 = arith.constant 1.000000e+00 : f32
    %28 = vector.broadcast %cst_11 : f32 to vector<8x128xf32>
    %29 = arith.select %27, %28, %25 : vector<8x128xi1>, vector<8x128xf32>
    %cst_12 = arith.constant 1.000000e+00 : f32
    %30 = vector.broadcast %cst_12 : f32 to vector<8x128xf32>
    %31 = arith.addf %30, %25 : vector<8x128xf32>
    %32 = arith.divf %29, %31 : vector<8x128xf32>
    %33 = arith.mulf %32, %32 : vector<8x128xf32>
    %34 = arith.mulf %33, %14 : vector<8x128xf32>
    %c0_i32 = arith.constant 0 : i32
    %35 = arith.cmpi slt, %arg1, %c0_i32 : i32
    %36 = arith.extui %35 : i1 to i32
    %c0_i32_13 = arith.constant 0 : i32
    %37 = arith.cmpi ne, %36, %c0_i32_13 : i32
    scf.if %37 {
      %41 = vector.shape_cast %34 : vector<8x128xf32> to vector<1x8x128xf32>
      %cst_16 = arith.constant dense<0.000000e+00> : vector<8x128xf32>
      %42 = vector.multi_reduction <add>, %41, %cst_16 [0] : vector<1x8x128xf32> to vector<8x128xf32>
      %43 = arith.index_cast %arg0 : i32 to index
      %44 = memref.load %arg2[%43] : memref<10xf32, #tpu.memory_space<smem>>
      %45 = vector.broadcast %44 : f32 to vector<8x128xf32>
      %46 = arith.mulf %45, %42 : vector<8x128xf32>
      %c0_17 = arith.constant 0 : index
      %c0_18 = arith.constant 0 : index
      %c0_19 = arith.constant 0 : index
      %c0_20 = arith.constant 0 : index
      %47 = vector.load %arg5[%c0_17, %c0_18, %c0_19, %c0_20] : memref<1x1x8x128xf32, #tpu.memory_space<vmem>>, vector<1x1x8x128xf32>
      %48 = vector.shape_cast %47 : vector<1x1x8x128xf32> to vector<8x128xf32>
      %49 = vector.shape_cast %46 : vector<8x128xf32> to vector<1x1x8x128xf32>
      tpu.vector_store %arg5[%c0_17, %c0_18, %c0_19, %c0_20], %49 {strides = array<i32>} : memref<1x1x8x128xf32, #tpu.memory_space<vmem>>, vector<1x1x8x128xf32>,
    } else {
    }
    %c0_i32_14 = arith.constant 0 : i32
    %38 = arith.cmpi eq, %arg1, %c0_i32_14 : i32
    %39 = arith.extui %38 : i1 to i32
    %c0_i32_15 = arith.constant 0 : i32
    %40 = arith.cmpi ne, %39, %c0_i32_15 : i32
    scf.if %40 {
      %41 = tpu.iota {dimensions = array<i32: 0>} : vector<8x128xi32>
      %42 = tpu.iota {dimensions = array<i32: 1>} : vector<8x128xi32>
      %c1024_i32 = arith.constant 1024 : i32
      %43 = arith.muli %arg1, %c1024_i32 : i32
      %c256_i32 = arith.constant 256 : i32
      %44 = arith.subi %c256_i32, %43 : i32
      %c128_i32 = arith.constant 128 : i32
      %45 = vector.broadcast %c128_i32 : i32 to vector<8x128xi32>
      %46 = arith.muli %41, %45 : vector<8x128xi32>
      %47 = arith.addi %46, %42 : vector<8x128xi32>
      %48 = vector.broadcast %44 : i32 to vector<8x128xi32>
      %49 = arith.cmpi slt, %47, %48 : vector<8x128xi32>
      %cst_16 = arith.constant 0.000000e+00 : f32
      %50 = vector.broadcast %cst_16 : f32 to vector<8x128xf32>
      %51 = arith.select %49, %34, %50 : vector<8x128xi1>, vector<8x128xf32>
      %52 = vector.shape_cast %51 : vector<8x128xf32> to vector<1x8x128xf32>
      %cst_17 = arith.constant dense<0.000000e+00> : vector<8x128xf32>
      %53 = vector.multi_reduction <add>, %52, %cst_17 [0] : vector<1x8x128xf32> to vector<8x128xf32>
      %54 = arith.index_cast %arg0 : i32 to index
      %55 = memref.load %arg2[%54] : memref<10xf32, #tpu.memory_space<smem>>
      %56 = vector.broadcast %55 : f32 to vector<8x128xf32>
      %57 = arith.mulf %56, %53 : vector<8x128xf32>
      %c0_18 = arith.constant 0 : index
      %c0_19 = arith.constant 0 : index
      %c0_20 = arith.constant 0 : index
      %c0_21 = arith.constant 0 : index
      %58 = vector.load %arg5[%c0_18, %c0_19, %c0_20, %c0_21] : memref<1x1x8x128xf32, #tpu.memory_space<vmem>>, vector<1x1x8x128xf32>
      %59 = vector.shape_cast %58 : vector<1x1x8x128xf32> to vector<8x128xf32>
      %60 = vector.shape_cast %57 : vector<8x128xf32> to vector<1x1x8x128xf32>
      tpu.vector_store %arg5[%c0_18, %c0_19, %c0_20, %c0_21], %60 {strides = array<i32>} : memref<1x1x8x128xf32, #tpu.memory_space<vmem>>, vector<1x1x8x128xf32>,
    } else {
    }
    return
  }
  func.func @transform_0(%arg0: i32, %arg1: i32) -> i32 {
    %c0_i32 = arith.constant 0 : i32
    %c0_i32_0 = arith.constant 0 : i32
    return %c0_i32 : i32
  }
  func.func @transform_1(%arg0: i32, %arg1: i32) -> (i32, i32, i32) {
    %c0_i32 = arith.constant 0 : i32
    %c0_i32_0 = arith.constant 0 : i32
    return %arg0, %arg1, %c0_i32 : i32, i32, i32
  }
  func.func @transform_2(%arg0: i32, %arg1: i32) -> (i32, i32, i32) {
    %c0_i32 = arith.constant 0 : i32
    %c0_i32_0 = arith.constant 0 : i32
    return %arg0, %arg1, %c0_i32 : i32, i32, i32
  }
  func.func @transform_3(%arg0: i32, %arg1: i32) -> (i32, i32, i32, i32) {
    %c0_i32 = arith.constant 0 : i32
    %c0_i32_0 = arith.constant 0 : i32
    %c0_i32_1 = arith.constant 0 : i32
    return %arg0, %arg1, %c0_i32, %c0_i32_0 : i32, i32, i32, i32
  }
}

</mosaic_0001>

<llo_original>
// kernel: tpu_custom_call.1
$region0: #{tpu_custom_call.1}
  #allocation0 [shape = 'u32[]', space=smem, size = 0x4, offset = 0x4, fixed_abs, tag = 'smem constant byte address 0x4 - core index']
  #allocation1 [shape = 'u32[144,128]{1,0:T(1,128)}', space=vmem, size = 0x12000, scoped, tag = 'internal scratch']
  %s0 = inlined_call_operand.hbm [shape: f32[10], index: 0, kind: input, shape index: {}]
  %s1 = inlined_call_operand.hbm [shape: f32[10,2,128], index: 1, kind: input, shape index: {}]
  %s2 = inlined_call_operand.hbm [shape: f32[10,2,128], index: 2, kind: input, shape index: {}]
  %s3 = inlined_call_operand.hbm [shape: f32[10,1,8,128], index: 3, kind: output, shape index: {}]
  %s4 = sld [smem:[#allocation0]]
  $region65: #{tpu_custom_call.1} parent=0
    _
  %s6 = ssub.s32 1, %s4
  %s7 = scalar_select 0, %s6, %s4
  $region1: #{tpu_custom_call.1} parent=0
    #allocation2 [shape = 'u8[512]{0}', space=smem, size = 0x200, scoped, tag = 'input window, operand 0, single buffered']
    #allocation3 [shape = 's32[2]{0}', space=sflag, size = 0x8, scoped, tag = 'scoped memory for tpu_custom_call.1']
    #allocation4 [shape = 's32[2]{0}', space=sflag, size = 0x8, scoped, tag = 'scoped memory for tpu_custom_call.1']
    #allocation5 [shape = 's32[2]{0}', space=sflag, size = 0x8, scoped, tag = 'scoped memory for tpu_custom_call.1']
    #allocation6 [shape = 'u8[8192]{0}', space=vmem, size = 0x2000, scoped, tag = 'input window, operand 1']
    #allocation7 [shape = 'u8[8192]{0}', space=vmem, size = 0x2000, scoped, tag = 'input window, operand 2']
    #allocation8 [shape = 's32[2]{0}', space=sflag, size = 0x8, scoped, tag = 'scoped memory for tpu_custom_call.1']
    #allocation9 [shape = 'u8[8192]{0}', space=vmem, size = 0x2000, scoped, tag = 'output window, operand 0']
    %8 = vsyncpa [#allocation5], 0
    %9 = vsyncpa [#allocation3], 0
    %s10 = scalar_lea.sflag [#allocation3], 1
    %11 = vsyncpa %s10, 0
    %12 = vsyncpa [#allocation8], 0
    %s13 = scalar_lea.sflag [#allocation8], 1
    %14 = vsyncpa %s13, 0
    %15 = vsyncpa [#allocation4], 0
    %s16 = scalar_lea.sflag [#allocation4], 1
    %17 = vsyncpa %s16, 0
    loop: start=0, step=1, limit=12
    $region2: #{tpu_custom_call.1} parent=1 // loop_pre_header
      _
    $region3: #{tpu_custom_call.1} parent=1 // loop_header
      %s19 = sphi 0, %s23
      %p20 = scmp.ge.s32.totalorder %s19, 12
      %s26 = sphi 0, %s38
      %s27 = sphi 0, %s34
      %s28 = sphi 0, %s26
      %s29 = sphi 0, %s27
      %s30 = sphi 0, %s28
      %s31 = sphi 0, %s29
      %s39 = sphi 0, %s39
      %s41 = sphi 0, %s39
      %s42 = sphi 0, %s41
      %s56 = sphi 0, %s42
      %s64 = sphi 0, %s66
      %s67 = sphi 0, %s64
      %s68 = sphi 0, %s67
      %s84 = sphi 0, %s68
      %s92 = sphi 0, %s94
      %s95 = sphi 0, %s92
      %s96 = sphi 0, %s95
      %s112 = sphi 0, %s96
      %s120 = sphi 0, %s122
      %s123 = sphi 0, %s120
      %s124 = sphi 0, %s123
      %s140 = sphi 0, %s124
    $region4: #{tpu_custom_call.1} parent=1 // loop_header_branch
      %22 = sbr.rel (%p20) target = $region8
    $region5: #{tpu_custom_call.1} parent=1 // loop_body
      %s24 = ssub.s32 %s19, 1
      %s25 = ssub.s32 %s19, 2
      %s32 = sadd.s32 1, %s27
      %p33 = scmp.ge.s32.totalorder %s32, 1
      %s34 = scalar_select %p33, 0, %s32
      %s35 = sadd.s32 1, %s26
      %s36 = scalar_select %p33, %s35, %s26
      %p37 = scmp.ge.s32.totalorder %s36, 10
      %s38 = scalar_select %p37, 0, %s36
      %s40 = sadd.s32 %s39, 1
      %p43 = scmp.eq.s32.totalorder %s19, 9
      %p44 = scmp.ne.s32.totalorder %s39, %s41
      %p45 = scmp.eq.s32.totalorder %s19, 0
      %p46 = por %p44, %p45
      %p47 = scmp.ne.s32.totalorder %s39, %s41
      %p48 = scmp.eq.s32.totalorder %s24, 9
      %p49 = por %p47, %p48
      %p50 = scmp.ne.s32.totalorder %s41, %s42
      %p51 = scmp.eq.s32.totalorder %s24, 0
      %p52 = por %p50, %p51
      %p53 = scmp.ne.s32.totalorder %s41, %s42
      %p54 = scmp.eq.s32.totalorder %s25, 9
      %p55 = por %p53, %p54
      %p57 = scmp.ne.s32.totalorder %s42, %s56
      %p58 = scmp.eq.s32.totalorder %s25, 0
      %p59 = por %p57, %p58
      %s60 = ssub.s32 %s26, %s38
      %s61 = ssub.s32 %s27, %s34
      %s62 = sor.u32 %s60, %s61
      %p63 = scmp.eq.s32.totalorder %s62, 0
      %s65 = sadd.s32 %s64, 1
      %s66 = scalar_select %p63, %s64, %s65
      %p69 = pneg %p63
      %p70 = scmp.eq.s32.totalorder %s19, 9
      %p71 = por %p69, %p70
      %p72 = scmp.ne.s32.totalorder %s64, %s67
      %p73 = scmp.eq.s32.totalorder %s19, 0
      %p74 = por %p72, %p73
      %p75 = scmp.ne.s32.totalorder %s64, %s67
      %p76 = scmp.eq.s32.totalorder %s24, 9
      %p77 = por %p75, %p76
      %p78 = scmp.ne.s32.totalorder %s67, %s68
      %p79 = scmp.eq.s32.totalorder %s24, 0
      %p80 = por %p78, %p79
      %p81 = scmp.ne.s32.totalorder %s67, %s68
      %p82 = scmp.eq.s32.totalorder %s25, 9
      %p83 = por %p81, %p82
      %p85 = scmp.ne.s32.totalorder %s68, %s84
      %p86 = scmp.eq.s32.totalorder %s25, 0
      %p87 = por %p85, %p86
      %s88 = ssub.s32 %s26, %s38
      %s89 = ssub.s32 %s27, %s34
      %s90 = sor.u32 %s88, %s89
      %p91 = scmp.eq.s32.totalorder %s90, 0
      %s93 = sadd.s32 %s92, 1
      %s94 = scalar_select %p91, %s92, %s93
      %p97 = pneg %p91
      %p98 = scmp.eq.s32.totalorder %s19, 9
      %p99 = por %p97, %p98
      %p100 = scmp.ne.s32.totalorder %s92, %s95
      %p101 = scmp.eq.s32.totalorder %s19, 0
      %p102 = por %p100, %p101
      %p103 = scmp.ne.s32.totalorder %s92, %s95
      %p104 = scmp.eq.s32.totalorder %s24, 9
      %p105 = por %p103, %p104
      %p106 = scmp.ne.s32.totalorder %s95, %s96
      %p107 = scmp.eq.s32.totalorder %s24, 0
      %p108 = por %p106, %p107
      %p109 = scmp.ne.s32.totalorder %s95, %s96
      %p110 = scmp.eq.s32.totalorder %s25, 9
      %p111 = por %p109, %p110
      %p113 = scmp.ne.s32.totalorder %s96, %s112
      %p114 = scmp.eq.s32.totalorder %s25, 0
      %p115 = por %p113, %p114
      %s116 = ssub.s32 %s26, %s38
      %s117 = ssub.s32 %s27, %s34
      %s118 = sor.u32 %s116, %s117
      %p119 = scmp.eq.s32.totalorder %s118, 0
      %s121 = sadd.s32 %s120, 1
      %s122 = scalar_select %p119, %s120, %s121
      %p125 = pneg %p119
      %p126 = scmp.eq.s32.totalorder %s19, 9
      %p127 = por %p125, %p126
      %p128 = scmp.ne.s32.totalorder %s120, %s123
      %p129 = scmp.eq.s32.totalorder %s19, 0
      %p130 = por %p128, %p129
      %p131 = scmp.ne.s32.totalorder %s120, %s123
      %p132 = scmp.eq.s32.totalorder %s24, 9
      %p133 = por %p131, %p132
      %p134 = scmp.ne.s32.totalorder %s123, %s124
      %p135 = scmp.eq.s32.totalorder %s24, 0
      %p136 = por %p134, %p135
      %p137 = scmp.ne.s32.totalorder %s123, %s124
      %p138 = scmp.eq.s32.totalorder %s25, 9
      %p139 = por %p137, %p138
      %p141 = scmp.ne.s32.totalorder %s124, %s140
      %p142 = scmp.eq.s32.totalorder %s25, 0
      %p143 = por %p141, %p142
      %p144 = scmp.le.s32.totalorder 1, %s19
      %p145 = scmp.lt.s32.totalorder %s19, 11
      %p146 = pnand %p144, %p145
      %p147 = pneg %p146
      // Predicated region
      $region9: #{tpu_custom_call.1} parent=5 // pred_check
        _
      $region10: #{tpu_custom_call.1} parent=5 // pred_check_branch
        %149 = sbr.rel (%p146) target = $region12
      $region11: #{tpu_custom_call.1} parent=5 // pred_region
        %s150 = ssub.s32 %s19, 1
        // Predicated region
        $region13: #{tpu_custom_call.1} parent=11 // pred_check
          %p151 = pneg %p52
        $region14: #{tpu_custom_call.1} parent=11 // pred_check_branch
          %153 = sbr.rel (%p151) target = $region16
        $region15: #{tpu_custom_call.1} parent=11 // pred_region
          %s155 = ssub.s32 16, 16
          %156 = vsyncadd [#allocation5], %s155
          %159 = dma.hbm_to_smem %s0, 16, [#allocation2], [#allocation5]
        $region16: #{tpu_custom_call.1} parent=11 // pred_fallthru
          _
      $region12: #{tpu_custom_call.1} parent=5 // pred_fallthru
        _
      %p160 = scmp.lt.s32.totalorder %s19, 10
      // Predicated region
      $region17: #{tpu_custom_call.1} parent=5 // pred_check
        %p161 = pneg %p160
      $region18: #{tpu_custom_call.1} parent=5 // pred_check_branch
        %163 = sbr.rel (%p161) target = $region20
      $region19: #{tpu_custom_call.1} parent=5 // pred_region
        // Predicated region
        $region21: #{tpu_custom_call.1} parent=19 // pred_check
          %p164 = pneg %p74
        $region22: #{tpu_custom_call.1} parent=19 // pred_check_branch
          %166 = sbr.rel (%p164) target = $region24
        $region23: #{tpu_custom_call.1} parent=19 // pred_region
          %s167 = sand.u32 %s64, 1
          %s168 = scalar_lea.sflag [#allocation3], %s167
          %s169 = sand.u32 %s64, 1
          %s170 = smul.addr %s169, 8
          %s171 = scalar_lea.vmem [#allocation6], %s170
          %s172 = smul.u32 4, %s27
          %s173 = ssub.s32 1, %s172
          %s174 = smul.u32 32, %s173
          %s176 = ssub.s32 128, %s174
          %177 = vsyncadd %s168, %s176
          %p178 = scmp.ne.s32.totalorder 0, %s174
          %s179 = sadd.s32 %s172, %s26
          %s180 = smul.addr %s179, 32
          %s181 = scalar_lea.hbm %s1, %s180
          %s182 = smul.u32 2, %s173
          %s183 = sshll.u32 %s171, 4
          %s184 = int_to_ptr.vmem [resolvable:$true] %s183
          %s185 = sshll.u32 %s182, 4
          %189 = dma.hbm_to_vmem [thread:$0]  (%p178), %s181, %s185, %s184, %s168, 32, 32, 2
        $region24: #{tpu_custom_call.1} parent=19 // pred_fallthru
          _
        // Predicated region
        $region25: #{tpu_custom_call.1} parent=19 // pred_check
          %p190 = pneg %p102
        $region26: #{tpu_custom_call.1} parent=19 // pred_check_branch
          %192 = sbr.rel (%p190) target = $region28
        $region27: #{tpu_custom_call.1} parent=19 // pred_region
          %s193 = sand.u32 %s92, 1
          %s194 = scalar_lea.sflag [#allocation8], %s193
          %s195 = sand.u32 %s92, 1
          %s196 = smul.addr %s195, 8
          %s197 = scalar_lea.vmem [#allocation7], %s196
          %s198 = smul.u32 4, %s27
          %s199 = ssub.s32 1, %s198
          %s200 = smul.u32 32, %s199
          %s202 = ssub.s32 128, %s200
          %203 = vsyncadd %s194, %s202
          %p204 = scmp.ne.s32.totalorder 0, %s200
          %s205 = sadd.s32 %s198, %s26
          %s206 = smul.addr %s205, 32
          %s207 = scalar_lea.hbm %s2, %s206
          %s208 = smul.u32 2, %s199
          %s209 = sshll.u32 %s197, 4
          %s210 = int_to_ptr.vmem [resolvable:$true] %s209
          %s211 = sshll.u32 %s208, 4
          %215 = dma.hbm_to_vmem [thread:$0]  (%p204), %s207, %s211, %s210, %s194, 32, 32, 2
        $region28: #{tpu_custom_call.1} parent=19 // pred_fallthru
          _
      $region20: #{tpu_custom_call.1} parent=5 // pred_fallthru
        _
      %p216 = scmp.le.s32.totalorder 1, %s19
      %p217 = scmp.lt.s32.totalorder %s19, 11
      %p218 = pnand %p216, %p217
      %p219 = pneg %p218
      // Predicated region
      $region29: #{tpu_custom_call.1} parent=5 // pred_check
        _
      $region30: #{tpu_custom_call.1} parent=5 // pred_check_branch
        %221 = sbr.rel (%p218) target = $region32
      $region31: #{tpu_custom_call.1} parent=5 // pred_region
        %s222 = ssub.s32 %s19, 1
        // Predicated region
        $region33: #{tpu_custom_call.1} parent=31 // pred_check
          %p223 = pneg %p52
        $region34: #{tpu_custom_call.1} parent=31 // pred_check_branch
          %225 = sbr.rel (%p223) target = $region36
        $region35: #{tpu_custom_call.1} parent=31 // pred_region
          %226 = dma.done [#allocation5], 16
        $region36: #{tpu_custom_call.1} parent=31 // pred_fallthru
          _
        %s227 = sand.u32 %s67, 1
        %s228 = scalar_lea.sflag [#allocation3], %s227
        %s229 = sand.u32 %s67, 1
        %s230 = smul.addr %s229, 8
        %s231 = scalar_lea.vmem [#allocation6], %s230
        // Predicated region
        $region37: #{tpu_custom_call.1} parent=31 // pred_check
          %p232 = pneg %p80
        $region38: #{tpu_custom_call.1} parent=31 // pred_check_branch
          %234 = sbr.rel (%p232) target = $region40
        $region39: #{tpu_custom_call.1} parent=31 // pred_region
          %235 = dma.done %s228, 128
        $region40: #{tpu_custom_call.1} parent=31 // pred_fallthru
          _
        %s236 = sand.u32 %s95, 1
        %s237 = scalar_lea.sflag [#allocation8], %s236
        %s238 = sand.u32 %s95, 1
        %s239 = smul.addr %s238, 8
        %s240 = scalar_lea.vmem [#allocation7], %s239
        // Predicated region
        $region41: #{tpu_custom_call.1} parent=31 // pred_check
          %p241 = pneg %p108
        $region42: #{tpu_custom_call.1} parent=31 // pred_check_branch
          %243 = sbr.rel (%p241) target = $region44
        $region43: #{tpu_custom_call.1} parent=31 // pred_region
          %244 = dma.done %s237, 128
        $region44: #{tpu_custom_call.1} parent=31 // pred_fallthru
          _
        %245 = sfence
        %p246 = pneg %p52
        %p247 = pneg %p49
        %s248 = sand.u32 %s67, 1
        %s249 = scalar_lea.sflag [#allocation3], %s248
        %s250 = sand.u32 %s67, 1
        %s251 = smul.addr %s250, 8
        %s252 = scalar_lea.vmem [#allocation6], %s251
        %p253 = pneg %p80
        %p254 = pneg %p77
        %s255 = sand.u32 %s95, 1
        %s256 = scalar_lea.sflag [#allocation8], %s255
        %s257 = sand.u32 %s95, 1
        %s258 = smul.addr %s257, 8
        %s259 = scalar_lea.vmem [#allocation7], %s258
        %p260 = pneg %p108
        %p261 = pneg %p105
        %p262 = pneg %p136
        %p263 = pneg %p133
        %s264 = sand.u32 %s123, 1
        %s265 = scalar_lea.sflag [#allocation4], %s264
        %s266 = sand.u32 %s123, 1
        %s267 = smul.addr %s266, 8
        %s268 = scalar_lea.vmem [#allocation9], %s267
        %s269 = smul.u32 4, %s29
        %s270 = ssub.s32 1, %s269
        %s271 = smul.u32 32, %s270
        %s272 = smul.u32 4, %s29
        %s273 = ssub.s32 1, %s272
        %s274 = smul.u32 32, %s273
        %v275 = vld [vmem:[%s231] sm:$0xff]
        %v276 = vld [vmem:[%s240] sm:$0xff]
        %v277 = vand.u32 2147483647, %v275
        %v278 = vsub.f32 0.0, %v277
        %v279 = vmul.f32 %v278, 1.442695
        %v280 = vpow.pop %v279
        %v281 = vmin.f32 %v275, 0.0
        %v282 = vadd.f32 %v280, 1.0
        %v283 = vlog2.pop %v282
        %v284 = vmul.f32 %v283, 0.6931472
        %v285 = vmul.f32 -0.5, %v280
        %v286 = vadd.f32 %v285, 1.0
        %v287 = vmul.f32 %v286, %v280
        %v288 = vand.u32 2147483647, %v280
        %vm289 = vcmp.lt.f32.partialorder %v288, 0.0004427343
        %v290 = vsel %vm289, %v287, %v284
        %v291 = vsub.f32 %v281, %v290
        %v292 = vmul.f32 %v275, %v276
        %v293 = vsub.f32 %v275, %v292
        %v294 = vsub.f32 %v293, %v291
        %v295 = vsub.f32 0.0, %v275
        %v296 = vmul.f32 %v276, 2.0
        %v297 = vsub.f32 %v296, 1.0
        %v298 = vmul.f32 %v295, %v297
        %v299 = vand.u32 2147483647, %v298
        %v300 = vsub.f32 0.0, %v299
        %v301 = vmul.f32 %v300, 1.442695
        %v302 = vpow.pop %v301
        %vm303 = vcmp.ge.f32.partialorder %v298, 0.0
        %v304 = vsel %vm303, 1.0, %v302
        %v305 = vadd.f32 %v302, 1.0
        %v306 = vrcp.pop %v305
        %v307 = vmul.f32 %v304, %v306
        %v308 = vmul.f32 %v307, %v307
        %v309 = vmul.f32 %v308, %v294
        %p310 = scmp.lt.s32.totalorder %s29, 0
        // Predicated region
        $region45: #{tpu_custom_call.1} parent=31 // pred_check
          %p311 = pneg %p310
        $region46: #{tpu_custom_call.1} parent=31 // pred_check_branch
          %313 = sbr.rel (%p311) target = $region48
        $region47: #{tpu_custom_call.1} parent=31 // pred_region
          %v314 = vadd.f32 %v309, 0.0
          %s315 = sld [smem:[#allocation2 + %s28]]
          %v316 = vstv %s315
          %v317 = vmul.f32 %v316, %v314
          %318 = vst [vmem:[%s268] sm:$0xff] %v317
        $region48: #{tpu_custom_call.1} parent=31 // pred_fallthru
          _
        %p319 = scmp.eq.s32.totalorder %s29, 0
        // Predicated region
        $region49: #{tpu_custom_call.1} parent=31 // pred_check
          %p320 = pneg %p319
        $region50: #{tpu_custom_call.1} parent=31 // pred_check_branch
          %322 = sbr.rel (%p320) target = $region52
        $region51: #{tpu_custom_call.1} parent=31 // pred_region
          %v323 = vlaneseq
          %v324 = vshrl.u32 %v323, 7
          %v325 = vlaneseq
          %v326 = vand.u32 %v325, 127
          %s327 = smul.u32 %s29, 1024
          %s328 = ssub.s32 256, %s327
          %v329 = vmul.u32 %v324, 128
          %v330 = vadd.s32 %v329, %v326
          %v331 = vstv %s328
          %vm332 = vcmp.lt.s32.totalorder %v330, %v331
          %v333 = vsel %vm332, %v309, 0.0
          %v334 = vadd.f32 %v333, 0.0
          %s335 = sld [smem:[#allocation2 + %s28]]
          %v336 = vstv %s335
          %v337 = vmul.f32 %v336, %v334
          %338 = vst [vmem:[%s268] sm:$0xff] %v337
        $region52: #{tpu_custom_call.1} parent=31 // pred_fallthru
          _
        %s339 = sand.u32 %s123, 1
        %s340 = scalar_lea.sflag [#allocation4], %s339
        %s341 = sand.u32 %s123, 1
        %s342 = smul.addr %s341, 8
        %s343 = scalar_lea.vmem [#allocation9], %s342
        // Predicated region
        $region53: #{tpu_custom_call.1} parent=31 // pred_check
          %p344 = pneg %p133
        $region54: #{tpu_custom_call.1} parent=31 // pred_check_branch
          %346 = sbr.rel (%p344) target = $region56
        $region55: #{tpu_custom_call.1} parent=31 // pred_region
          %s348 = ssub.s32 128, 128
          %349 = vsyncadd %s340, %s348
          %s350 = sadd.s32 %s29, %s28
          %s351 = smul.addr %s350, 128
          %s352 = scalar_lea.hbm %s3, %s351
          %s354 = sshll.u32 %s343, 4
          %s355 = int_to_ptr.vmem [resolvable:$true] %s354
          %357 = dma.vmem_to_hbm [thread:$0]  %s355, 128, %s352, %s340
        $region56: #{tpu_custom_call.1} parent=31 // pred_fallthru
          _
      $region32: #{tpu_custom_call.1} parent=5 // pred_fallthru
        _
      %p358 = scmp.le.s32.totalorder 2, %s19
      // Predicated region
      $region57: #{tpu_custom_call.1} parent=5 // pred_check
        %p359 = pneg %p358
      $region58: #{tpu_custom_call.1} parent=5 // pred_check_branch
        %361 = sbr.rel (%p359) target = $region60
      $region59: #{tpu_custom_call.1} parent=5 // pred_region
        %s362 = ssub.s32 %s19, 2
        // Predicated region
        $region61: #{tpu_custom_call.1} parent=59 // pred_check
          %p363 = pneg %p139
        $region62: #{tpu_custom_call.1} parent=59 // pred_check_branch
          %365 = sbr.rel (%p363) target = $region64
        $region63: #{tpu_custom_call.1} parent=59 // pred_region
          %s366 = sand.u32 %s124, 1
          %s367 = scalar_lea.sflag [#allocation4], %s366
          %s368 = sand.u32 %s124, 1
          %s369 = smul.addr %s368, 8
          %s370 = scalar_lea.vmem [#allocation9], %s369
          %371 = dma.done %s367, 128
        $region64: #{tpu_custom_call.1} parent=59 // pred_fallthru
          _
      $region60: #{tpu_custom_call.1} parent=5 // pred_fallthru
        _
    $region6: #{tpu_custom_call.1} parent=1 // loop_footer
      %s23 = sadd.s32 1, %s19
    $region7: #{tpu_custom_call.1} parent=1 // loop_footer_branch
      %18 = sbr.rel target = $region3
    $region8: #{tpu_custom_call.1} parent=1 // loop_exit
      _
    %372 = vsyncpa [#allocation3], 1
    %s373 = scalar_lea.sflag [#allocation3], 1
    %374 = vsyncpa %s373, 1
    %375 = vsyncpa [#allocation8], 1
    %s376 = scalar_lea.sflag [#allocation8], 1
    %377 = vsyncpa %s376, 1
    %378 = vsyncpa [#allocation4], 1
    %s379 = scalar_lea.sflag [#allocation4], 1
    %380 = vsyncpa %s379, 1
    %381 = vsyncpa [#allocation5], 1
    %s382 = scalar_lea.sflag [#allocation5], 1
    %383 = vsyncpa %s382, 1

</llo_original>
